<compile_context>
chip_gen: v6e
topology: v6e:2x2x1
jax: 0.10.0
libtpu: 0.0.40
codegen_flags: <defaults>
</compile_context>

<pallas_src>
import functools

import jax
import jax.numpy as jnp
from jax.experimental import pallas as pl
from jax.experimental.pallas import tpu as pltpu

NEG_INF = -1e30  # finite mask value (safe with self-loops; denom also eps-guarded)


# --------------------------------------------------------------------------
# Kernels
# --------------------------------------------------------------------------
def _proj_kernel(x_ref, w_ref, gl_ref, gr_ref):
    """One wide MXU matmul: x @ [Wl(all heads) | Wr(all heads)] -> split halves."""
    g = jnp.dot(x_ref[...], w_ref[...], preferred_element_type=jnp.float32)
    hf = gl_ref.shape[-1]
    gl_ref[...] = g[:, :hf].astype(gl_ref.dtype)
    gr_ref[...] = g[:, hf:].astype(gr_ref.dtype)


def _gatv2_attn_kernel(gl_ref, gr_ref, adj_ref, att_ref, bias_ref, out_ref,
                       m_sc, l_sc, acc_sc, *, heads, fout, apply_relu):
    """Blocked GATv2 attention with online softmax.

    gl_ref : [Tsrc, H*F]  source-transformed features (current src block)
    gr_ref : [Tdst, H*F]  target-transformed features (current dst block)
    adj_ref: [Tdst, Tsrc] dense adjacency tile (adj[i, j] = 1 iff edge j -> i)
    att_ref: [H, F]       per-head attention vector
    bias_ref:[1, H*F]     concat-layout bias
    out_ref: [Tdst, H*F]  concatenated per-head output (lane dense)
    scratch: m_sc/l_sc [Tdst, H] running max / denom, acc_sc [Tdst, H*F] accumulator
    """
    j = pl.program_id(1)

    @pl.when(j == 0)
    def _init():
        m_sc[...] = jnp.full_like(m_sc, NEG_INF)
        l_sc[...] = jnp.zeros_like(l_sc)
        acc_sc[...] = jnp.zeros_like(acc_sc)

    gl = gl_ref[...]                                   # [Ts, H*F]
    gr = gr_ref[...]                                   # [Td, H*F]
    mask = adj_ref[...] > 0                            # [Td, Ts]

    for h in range(heads):                             # static unroll (H is small)
        lo = h * fout
        hi = lo + fout
        gl_h = gl[:, lo:hi]                            # [Ts, F]
        gr_h = gr[:, lo:hi]                            # [Td, F]
        att_h = att_ref[h:h + 1, :]                    # [1, F]

        # Pairwise GATv2 pre-activation for this (dst, src) tile only.
        s = gr_h[:, None, :] + gl_h[None, :, :]        # [Td, Ts, F]
        s = jnp.where(s > 0, s, 0.2 * s)               # leaky_relu(neg_slope=0.2)
        e = jnp.sum(s * att_h[None, :, :], axis=-1)    # [Td, Ts] attention logits
        e = jnp.where(mask, e, NEG_INF)

        # Online softmax update for this head.
        m_prev = m_sc[:, h:h + 1]                      # [Td, 1]
        m_new = jnp.maximum(m_prev, jnp.max(e, axis=-1, keepdims=True))
        scale = jnp.exp(m_prev - m_new)                # [Td, 1]
        p = jnp.where(mask, jnp.exp(e - m_new), 0.0)   # [Td, Ts]

        l_sc[:, h:h + 1] = scale * l_sc[:, h:h + 1] + jnp.sum(p, axis=-1, keepdims=True)
        acc_sc[:, lo:hi] = scale * acc_sc[:, lo:hi] + jnp.dot(
            p, gl_h, preferred_element_type=jnp.float32)
        m_sc[:, h:h + 1] = m_new

    @pl.when(j == pl.num_programs(1) - 1)
    def _finalize():
        bias = bias_ref[...]                                            # [1, H*F]
        inv_l = pl.reciprocal(jnp.maximum(l_sc[...], 1e-30), approx=True)  # [Td, H]
        for h in range(heads):
            lo = h * fout
            hi = lo + fout
            o = acc_sc[:, lo:hi] * inv_l[:, h:h + 1] + bias[:, lo:hi]
            if apply_relu:
                o = jnp.maximum(o, 0.0)
            out_ref[:, lo:hi] = o.astype(out_ref.dtype)


def _linear_kernel(x_ref, w_ref, b_ref, out_ref):
    out_ref[...] = (jnp.dot(x_ref[...], w_ref[...],
                            preferred_element_type=jnp.float32)
                    + b_ref[...]).astype(out_ref.dtype)


# --------------------------------------------------------------------------
# Wrappers
# --------------------------------------------------------------------------
def _row_tile(n, target):
    t = n if n <= target else target
    assert n % t == 0, f"N={n} must be a multiple of tile {t}"
    return t


def fused_projection(x, w_all, hf):
    """x: [N, Fin]; w_all: [Fin, 2*hf]  ->  (gl [N, hf], gr [N, hf])."""
    N, Fin = x.shape
    tn = _row_tile(N, 256)
    return pl.pallas_call(
        _proj_kernel,
        out_shape=(jax.ShapeDtypeStruct((N, hf), jnp.float32),
                   jax.ShapeDtypeStruct((N, hf), jnp.float32)),
        grid_spec=pltpu.PrefetchScalarGridSpec(
            num_scalar_prefetch=0,
            grid=(N // tn,),
            in_specs=[pl.BlockSpec((tn, Fin), lambda i: (i, 0)),
                      pl.BlockSpec((Fin, 2 * hf), lambda i: (0, 0))],
            out_specs=[pl.BlockSpec((tn, hf), lambda i: (i, 0)),
                       pl.BlockSpec((tn, hf), lambda i: (i, 0))],
        ),
        compiler_params=pltpu.CompilerParams(dimension_semantics=("parallel",)),
    )(x, w_all)


def gatv2_conv(x, adj, w_all, att, bias, *, apply_relu=False):
    """x: [N, Fin]; adj: [N_dst, N_src]; w_all: [Fin, 2*H*F]; att: [H, F]; bias: [1, H*F].
    Returns concat-over-heads output [N, H*F] (head-major per node, as in PyG)."""
    N = x.shape[0]
    heads, fout = att.shape
    hf = heads * fout
    assert w_all.shape[1] == 2 * hf

    gl, gr = fused_projection(x, w_all, hf)

    # Block sizes sized well under any generation's VMEM budget (<=128 rows).
    td = _row_tile(N, 128)
    ts = _row_tile(N, 128)

    kernel = functools.partial(_gatv2_attn_kernel, heads=heads, fout=fout,
                               apply_relu=apply_relu)
    return pl.pallas_call(
        kernel,
        out_shape=jax.ShapeDtypeStruct((N, hf), jnp.float32),
        grid_spec=pltpu.PrefetchScalarGridSpec(
            num_scalar_prefetch=0,
            grid=(N // td, N // ts),
            in_specs=[
                pl.BlockSpec((ts, hf), lambda i, j: (j, 0)),        # gl (src block)
                pl.BlockSpec((td, hf), lambda i, j: (i, 0)),        # gr (dst block)
                pl.BlockSpec((td, ts), lambda i, j: (i, j)),        # adjacency tile
                pl.BlockSpec((heads, fout), lambda i, j: (0, 0)),   # att (shared)
                pl.BlockSpec((1, hf), lambda i, j: (0, 0)),         # bias (shared)
            ],
            out_specs=pl.BlockSpec((td, hf), lambda i, j: (i, 0)),
            scratch_shapes=[
                pltpu.VMEM((td, heads), jnp.float32),   # running max
                pltpu.VMEM((td, heads), jnp.float32),   # running denom
                pltpu.VMEM((td, hf), jnp.float32),      # output accumulator
            ],
        ),
        compiler_params=pltpu.CompilerParams(
            dimension_semantics=("parallel", "arbitrary")),
    )(gl, gr, adj, att, bias)


def linear(x, w, b):
    """x: [N, Din]; w: [Din, Dout]; b: [1, Dout]."""
    N, Din = x.shape
    Dout = w.shape[1]
    tn = _row_tile(N, 256)
    return pl.pallas_call(
        _linear_kernel,
        out_shape=jax.ShapeDtypeStruct((N, Dout), jnp.float32),
        grid_spec=pltpu.PrefetchScalarGridSpec(
            num_scalar_prefetch=0,
            grid=(N // tn,),
            in_specs=[pl.BlockSpec((tn, Din), lambda i: (i, 0)),
                      pl.BlockSpec((Din, Dout), lambda i: (0, 0)),
                      pl.BlockSpec((1, Dout), lambda i: (0, 0))],
            out_specs=pl.BlockSpec((tn, Dout), lambda i: (i, 0)),
        ),
        compiler_params=pltpu.CompilerParams(dimension_semantics=("parallel",)),
    )(x, w, b)


def gat_forward(params, x, adj):
    # gat1 -> relu (fused into kernel) -> dropout(identity, eval) -> gat6 -> line
    h = gatv2_conv(x, adj, params["g1_w"], params["g1_att"], params["g1_b"],
                   apply_relu=True)
    # TODO(synk): training-mode dropout omitted (identity in eval mode).
    h = gatv2_conv(h, adj, params["g6_w"], params["g6_att"], params["g6_b"],
                   apply_relu=False)
    return linear(h, params["lin_w"], params["lin_b"])


# --------------------------------------------------------------------------
# Deterministic parameter init (glorot-style weights, packed layouts)
# --------------------------------------------------------------------------
def init_params(key, node_dim, n_dim, heads):
    ks = jax.random.split(key, 8)

    def glorot(k, shape, fan_in, fan_out):
        scale = jnp.sqrt(6.0 / (fan_in + fan_out))
        return jax.random.uniform(k, shape, jnp.float32, -scale, scale)

    def pack_layer(kl, kr, fin, fout):
        wl = glorot(kl, (heads, fin, fout), fin, heads * fout)   # [H, Fin, F]
        wr = glorot(kr, (heads, fin, fout), fin, heads * fout)
        wl_p = jnp.transpose(wl, (1, 0, 2)).reshape(fin, heads * fout)
        wr_p = jnp.transpose(wr, (1, 0, 2)).reshape(fin, heads * fout)
        return jnp.concatenate([wl_p, wr_p], axis=1)             # [Fin, 2*H*F]

    # gat1: in=node_dim, out=n_dim per head
    g1_w = pack_layer(ks[0], ks[1], node_dim, n_dim)
    g1_att = glorot(ks[2], (heads, n_dim), n_dim, 1)
    g1_b = jnp.zeros((1, heads * n_dim), jnp.float32)

    # gat6: in=n_dim*heads, out=128 per head
    in2 = n_dim * heads
    g6_w = pack_layer(ks[3], ks[4], in2, 128)
    g6_att = glorot(ks[5], (heads, 128), 128, 1)
    g6_b = jnp.zeros((1, heads * 128), jnp.float32)

    # line: Linear(128*heads, 64)
    lin_in = 128 * heads
    lin_w = glorot(ks[6], (lin_in, 64), lin_in, 64)
    lin_b = jax.random.uniform(ks[7], (1, 64), jnp.float32,
                               -1.0 / jnp.sqrt(lin_in), 1.0 / jnp.sqrt(lin_in))

    return dict(g1_w=g1_w, g1_att=g1_att, g1_b=g1_b,
                g6_w=g6_w, g6_att=g6_att, g6_b=g6_b,
                lin_w=lin_w, lin_b=lin_b)


def build_dense_adj(edge_index, num_nodes):
    """edge_index: [2, E] with row 0 = source, row 1 = target.
    Returns adj[dst, src] with self-loops added (GATv2Conv default)."""
    src, dst = edge_index
    adj = jnp.zeros((num_nodes, num_nodes), jnp.float32)
    adj = adj.at[dst, src].set(1.0)
    adj = adj.at[jnp.arange(num_nodes), jnp.arange(num_nodes)].set(1.0)
    return adj


# --------------------------------------------------------------------------
if __name__ == "__main__":
    key = jax.random.PRNGKey(0)

    N = 16          # number of graph nodes
    node_dim = 8    # input node feature dim
    n_dim = 16      # gat1 per-head output dim
    heads = 2

    k_x, k_p = jax.random.split(key)
    x = jax.random.normal(k_x, (N, node_dim), jnp.float32)

    # Deterministic small graph: bidirectional ring.
    src = jnp.concatenate([jnp.arange(N), (jnp.arange(N) + 1) % N])
    dst = jnp.concatenate([(jnp.arange(N) + 1) % N, jnp.arange(N)])
    edge_index = jnp.stack([src, dst], axis=0)          # [2, E]
    adj = build_dense_adj(edge_index, N)                # [N_dst, N_src]

    params = init_params(k_p, node_dim, n_dim, heads)

    out = gat_forward(params, x, adj)
    jax.block_until_ready(out)

    assert out.shape == (N, 64), out.shape
    print("KERNEL_OK")
</pallas_src>

<mosaic_0001>
module attributes {stable_mosaic.version = 11 : i64} {
  func.func @_proj_kernel(%arg0: i32, %arg1: memref<16x8xf32, #tpu.memory_space<vmem>>, %arg2: memref<8x64xf32, #tpu.memory_space<vmem>>, %arg3: memref<16x32xf32, #tpu.memory_space<vmem>>, %arg4: memref<16x32xf32, #tpu.memory_space<vmem>>) attributes {dimension_semantics = [#tpu.dimension_semantics<parallel>], iteration_bounds = array<i64: 1>, scalar_prefetch = 0 : i64, scratch_operands = 0 : i64, tpu.core_type = #tpu.core_type<tc>, window_params = [{transform_indices = @transform_0, window_bounds = array<i64: 16, 8>}, {pipeline_mode = #tpu.pipeline_mode<synchronous>, transform_indices = @transform_1, window_bounds = array<i64: 8, 64>}, {transform_indices = @transform_2, window_bounds = array<i64: 16, 32>}, {transform_indices = @transform_3, window_bounds = array<i64: 16, 32>}]} {
    %c0 = arith.constant 0 : index
    %c0_0 = arith.constant 0 : index
    %0 = vector.load %arg1[%c0, %c0_0] : memref<16x8xf32, #tpu.memory_space<vmem>>, vector<16x8xf32>
    %c0_1 = arith.constant 0 : index
    %c0_2 = arith.constant 0 : index
    %1 = vector.load %arg2[%c0_1, %c0_2] : memref<8x64xf32, #tpu.memory_space<vmem>>, vector<8x64xf32>
    %cst = arith.constant dense<0.000000e+00> : vector<16x64xf32>
    %2 = tpu.matmul %0, %1, %cst {dimension_numbers = #tpu.dot_dimension_numbers<[1], [0], [0], [1], [0, 0, 1, 1], [], []>} : vector<16x8xf32>, vector<8x64xf32>, vector<16x64xf32> -> vector<16x64xf32>
    %3 = vector.extract_strided_slice %2 {offsets = [0, 0], sizes = [16, 32], strides = [1, 1]} : vector<16x64xf32> to vector<16x32xf32>
    %c0_3 = arith.constant 0 : index
    %c0_4 = arith.constant 0 : index
    %4 = vector.load %arg3[%c0_3, %c0_4] : memref<16x32xf32, #tpu.memory_space<vmem>>, vector<16x32xf32>
    tpu.vector_store %arg3[%c0_3, %c0_4], %3 {strides = array<i32>} : memref<16x32xf32, #tpu.memory_space<vmem>>, vector<16x32xf32>,
    %5 = vector.extract_strided_slice %2 {offsets = [0, 32], sizes = [16, 32], strides = [1, 1]} : vector<16x64xf32> to vector<16x32xf32>
    %c0_5 = arith.constant 0 : index
    %c0_6 = arith.constant 0 : index
    %6 = vector.load %arg4[%c0_5, %c0_6] : memref<16x32xf32, #tpu.memory_space<vmem>>, vector<16x32xf32>
    tpu.vector_store %arg4[%c0_5, %c0_6], %5 {strides = array<i32>} : memref<16x32xf32, #tpu.memory_space<vmem>>, vector<16x32xf32>,
    return
  }
  func.func @transform_0(%arg0: i32) -> (i32, i32) {
    %c0_i32 = arith.constant 0 : i32
    %c0_i32_0 = arith.constant 0 : i32
    return %arg0, %c0_i32 : i32, i32
  }
  func.func @transform_1(%arg0: i32) -> (i32, i32) {
    %c0_i32 = arith.constant 0 : i32
    %c0_i32_0 = arith.constant 0 : i32
    %c0_i32_1 = arith.constant 0 : i32
    return %c0_i32, %c0_i32_0 : i32, i32
  }
  func.func @transform_2(%arg0: i32) -> (i32, i32) {
    %c0_i32 = arith.constant 0 : i32
    %c0_i32_0 = arith.constant 0 : i32
    return %arg0, %c0_i32 : i32, i32
  }
  func.func @transform_3(%arg0: i32) -> (i32, i32) {
    %c0_i32 = arith.constant 0 : i32
    %c0_i32_0 = arith.constant 0 : i32
    return %arg0, %c0_i32 : i32, i32
  }
}

</mosaic_0001>

<llo_original>
// kernel: tpu_custom_call.1
$region0: #{tpu_custom_call.1}
  #allocation0 [shape = 'u32[]', space=smem, size = 0x4, offset = 0x4, fixed_abs, tag = 'smem constant byte address 0x4 - core index']
  #allocation1 [shape = 'u32[144,128]{1,0:T(1,128)}', space=vmem, size = 0x12000, scoped, tag = 'internal scratch']
  %s0 = inlined_call_operand.vmem [shape: f32[16,8], index: 0, kind: input, shape index: {}]
  %s1 = inlined_call_operand.vmem [shape: f32[8,64], index: 1, kind: input, shape index: {}]
  %s2 = inlined_call_operand.hbm [shape: f32[16,32], index: 2, kind: output, shape index: {0}]
  %s3 = inlined_call_operand.hbm [shape: f32[16,32], index: 3, kind: output, shape index: {1}]
  %4 = xla_tuple %s2, %s3
  %s5 = sld [smem:[#allocation0]]
  $region26: #{tpu_custom_call.1} parent=0
    _
  %s7 = ssub.s32 1, %s5
  %s8 = scalar_select 0, %s7, %s5
  $region1: #{tpu_custom_call.1} parent=0
    #allocation2 [shape = 'u8[8192]{0}', space=vmem, size = 0x2000, scoped, tag = 'output window, operand 0, single buffered']
    #allocation3 [shape = 's32[1]{0}', space=sflag, size = 0x4, scoped, tag = 'scoped memory for tpu_custom_call.1']
    #allocation4 [shape = 'u8[8192]{0}', space=vmem, size = 0x2000, scoped, tag = 'output window, operand 1, single buffered']
    #allocation5 [shape = 's32[1]{0}', space=sflag, size = 0x4, scoped, tag = 'scoped memory for tpu_custom_call.1']
    %9 = vsyncpa [#allocation3], 0
    %10 = vsyncpa [#allocation5], 0
    // Predicated region
    $region2: #{tpu_custom_call.1} parent=1 // pred_check
      _
    $region3: #{tpu_custom_call.1} parent=1 // pred_check_branch
      %12 = sbr.rel (0) target = $region5
    $region4: #{tpu_custom_call.1} parent=1 // pred_region
      _
    $region5: #{tpu_custom_call.1} parent=1 // pred_fallthru
      _
    // Predicated region
    $region6: #{tpu_custom_call.1} parent=1 // pred_check
      _
    $region7: #{tpu_custom_call.1} parent=1 // pred_check_branch
      %14 = sbr.rel (0) target = $region9
    $region8: #{tpu_custom_call.1} parent=1 // pred_region
      _
    $region9: #{tpu_custom_call.1} parent=1 // pred_fallthru
      _
    %v15 = vld [vmem:[%s0] sm:$0xff]
    %v16 = vld [vmem:[%s0 + $0x8] sm:$0xff]
    %v17 = vld [vmem:[%s1] sm:$0xff]
    %vm18 = vcmask 64512
    %v20 = vsel %vm18, %v15, 0
    %v23 = vsel %vm18, %v16, 0
    %25 = vmatprep.subr.mxu0 0.0
    %26 = vmatpush1.msra.mxu0 0.0
    %27 = vmatprep.subr.mxu0 0.0
    %28 = vmatpush1.msra.mxu0 0.0
    %29 = vmatprep.subr.mxu0 0.0
    %30 = vmatpush1.msra.mxu0 0.0
    %31 = vmatprep.subr.mxu0 0.0
    %32 = vmatpush1.msra.mxu0 0.0
    %33 = vmatprep.subr.mxu0 0.0
    %34 = vmatpush1.msra.mxu0 0.0
    %35 = vmatprep.subr.mxu0 0.0
    %36 = vmatpush1.msra.mxu0 0.0
    %37 = vmatprep.subr.mxu0 0.0
    %38 = vmatpush1.msra.mxu0 0.0
    %39 = vmatprep.subr.mxu0 0.0
    %40 = vmatpush1.msra.mxu0 0.0
    %41 = vmatprep.subr.mxu0 0.0
    %42 = vmatpush1.msra.mxu0 0.0
    %43 = vmatprep.subr.mxu0 0.0
    %44 = vmatpush1.msra.mxu0 0.0
    %45 = vmatprep.subr.mxu0 0.0
    %46 = vmatpush1.msra.mxu0 0.0
    %47 = vmatprep.subr.mxu0 0.0
    %48 = vmatpush1.msra.mxu0 0.0
    %49 = vmatprep.subr.mxu0 0.0
    %50 = vmatpush1.msra.mxu0 0.0
    %51 = vmatprep.subr.mxu0 0.0
    %52 = vmatpush1.msra.mxu0 0.0
    %53 = vmatprep.subr.mxu0 0.0
    %54 = vmatpush1.msra.mxu0 0.0
    %55 = vmatprep.subr.mxu0 0.0
    %56 = vmatpush1.msra.mxu0 %v17
    %57 = vmatprep.subr.mxu0 0.0
    %58 = vmatpush2.msra.mxu0 0.0
    %59 = vmatprep.subr.mxu0 0.0
    %60 = vmatpush2.msra.mxu0 0.0
    %61 = vmatprep.subr.mxu0 0.0
    %62 = vmatpush2.msra.mxu0 0.0
    %63 = vmatprep.subr.mxu0 0.0
    %64 = vmatpush2.msra.mxu0 0.0
    %65 = vmatprep.subr.mxu0 0.0
    %66 = vmatpush2.msra.mxu0 0.0
    %67 = vmatprep.subr.mxu0 0.0
    %68 = vmatpush2.msra.mxu0 0.0
    %69 = vmatprep.subr.mxu0 0.0
    %70 = vmatpush2.msra.mxu0 0.0
    %71 = vmatprep.subr.mxu0 0.0
    %72 = vmatpush2.msra.mxu0 0.0
    %73 = vmatprep.subr.mxu0 0.0
    %74 = vmatpush2.msra.mxu0 0.0
    %75 = vmatprep.subr.mxu0 0.0
    %76 = vmatpush2.msra.mxu0 0.0
    %77 = vmatprep.subr.mxu0 0.0
    %78 = vmatpush2.msra.mxu0 0.0
    %79 = vmatprep.subr.mxu0 0.0
    %80 = vmatpush2.msra.mxu0 0.0
    %81 = vmatprep.subr.mxu0 0.0
    %82 = vmatpush2.msra.mxu0 0.0
    %83 = vmatprep.subr.mxu0 0.0
    %84 = vmatpush2.msra.mxu0 0.0
    %85 = vmatprep.subr.mxu0 0.0
    %86 = vmatpush2.msra.mxu0 0.0
    %87 = vmatprep.subr.mxu0 0.0
    %88 = vmatpush2.msra.mxu0 0.0
    %89 = vmatprep.mubr.f32.mxu0 0.0
    %90 = vmatmul.mubr.f32.gmra.mxu0 %v20
    %v91 = vpop.f32.mrf.mxu0
    %v92 = vadd.f32 0.0, %v91
    %v93 = vpop.f32.mrf.mxu0
    %94 = vmatprep.mubr.f32.mxu0 0.0
    %95 = vmatmul.mubr.f32.gmra.mxu0 %v23
    %v96 = vpop.f32.mrf.mxu0
    %v97 = vadd.f32 0.0, %v96
    %v98 = vpop.f32.mrf.mxu0
    %99 = vdwg.mxu0
    %vm100 = vcmask 261120
    %101 = vst.msk [vmem:[#allocation2] sm:$0xff] %vm100, %v92
    %102 = vst.msk [vmem:[#allocation2 + $0x8] sm:$0xff] %vm100, %v97
    %105 = vrot.lane.b32.xlu0 %v92, 96
    %v106 = vpop.permute.xlu0 %105
    %107 = vrot.lane.b32.xlu0 %v97, 96
    %v108 = vpop.permute.xlu0 %107
    %111 = vst.msk [vmem:[#allocation4] sm:$0xff] %vm100, %v106
    %112 = vst.msk [vmem:[#allocation4 + $0x8] sm:$0xff] %vm100, %v108
    // Predicated region
    $region10: #{tpu_custom_call.1} parent=1 // pred_check
      _
    $region11: #{tpu_custom_call.1} parent=1 // pred_check_branch
      %114 = sbr.rel (0) target = $region13
    $region12: #{tpu_custom_call.1} parent=1 // pred_region
      %s116 = ssub.s32 256, 256
      %117 = vsyncadd [#allocation3], %s116
      %s118 = sshll.u32 [#allocation2], 4
      %s119 = int_to_ptr.vmem [resolvable:$true] %s118
      %124 = dma.vmem_to_hbm [thread:$0]  %s119, 256, %s2, [#allocation3], 128, 128, 8
    $region13: #{tpu_custom_call.1} parent=1 // pred_fallthru
      _
    // Predicated region
    $region14: #{tpu_custom_call.1} parent=1 // pred_check
      _
    $region15: #{tpu_custom_call.1} parent=1 // pred_check_branch
      %126 = sbr.rel (0) target = $region17
    $region16: #{tpu_custom_call.1} parent=1 // pred_region
      %s128 = ssub.s32 256, 256
      %129 = vsyncadd [#allocation5], %s128
      %s130 = sshll.u32 [#allocation4], 4
      %s131 = int_to_ptr.vmem [resolvable:$true] %s130
      %136 = dma.vmem_to_hbm [thread:$0]  %s131, 256, %s3, [#allocation5], 128, 128, 8
    $region17: #{tpu_custom_call.1} parent=1 // pred_fallthru
      _
    // Predicated region
    $region18: #{tpu_custom_call.1} parent=1 // pred_check
      _
    $region19: #{tpu_custom_call.1} parent=1 // pred_check_branch
      %138 = sbr.rel (0) target = $region21
    $region20: #{tpu_custom_call.1} parent=1 // pred_region
      %139 = dma.done [#allocation3], 256
    $region21: #{tpu_custom_call.1} parent=1 // pred_fallthru
      _
    // Predicated region
    $region22: #{tpu_custom_call.1} parent=1 // pred_check
      _
    $region23: #{tpu_custom_call.1} parent=1 // pred_check_branch
      %141 = sbr.rel (0) target = $region25
    $region24: #{tpu_custom_call.1} parent=1 // pred_region
      %142 = dma.done [#allocation5], 256
    $region25: #{tpu_custom_call.1} parent=1 // pred_fallthru
      _
    %143 = vsyncpa [#allocation3], 1
    %144 = vsyncpa [#allocation5], 1

</llo_original>
